<compile_context>
chip_gen: v5e
topology: v5e:2x2
jax: 0.10.0
libtpu: 0.0.40
codegen_flags: <defaults>
</compile_context>

<pallas_src>
import functools

import jax
import jax.numpy as jnp
from jax.experimental import pallas as pl
from jax.experimental.pallas import tpu as pltpu


# ---------------------------------------------------------------------------
# Tiling / budget helpers
# ---------------------------------------------------------------------------

def _round_up(x, m):
    return ((x + m - 1) // m) * m


def _sublane_packing(dtype):
    # f32 -> 8, bf16/f16 -> 16, int8/fp8 -> 32 (block second-to-last dim rule).
    return {4: 8, 2: 16, 1: 32}.get(jnp.dtype(dtype).itemsize, 8)


def _vmem_capacity_bytes():
    """Generation-aware physical VMEM; conservative fallback if unavailable."""
    try:
        info = pltpu.get_tpu_info()
        cap = int(getattr(info, "vmem_capacity_bytes", 0) or 0)
        if cap > 0:
            return cap
    except Exception:
        pass
    return 64 * 1024 * 1024          # safe on every generation (v7x has 64 MiB)


def _pick_tile_rows(rows, sub, itemsize, budget_bytes):
    """Largest row tile (multiple of `sub`) whose double-buffered input fits
    the budget; capped so large inputs keep >= ~4 pipelined grid steps."""
    per_row_bytes = 128 * itemsize
    max_rows = max(sub, (budget_bytes // (2 * per_row_bytes)) // sub * sub)
    rows_pad = _round_up(rows, sub)
    if rows_pad <= min(max_rows, 512):
        return int(rows_pad)                       # tiny input: one grid step
    return int(max(sub, min(max_rows, _round_up(pl.cdiv(rows, 4), sub))))


def _pick_tile_cols(cols, batch, itemsize, budget_bytes):
    """Column tile (multiple of 128) for the ragged 2D path."""
    per_col_bytes = max(batch, 8) * itemsize       # sublane dim pads to 8
    max_cols = max(128, (budget_bytes // (2 * per_col_bytes)) // 128 * 128)
    cols_pad = _round_up(cols, 128)
    if cols_pad <= min(max_cols, 64 * 1024):
        return int(cols_pad)                       # small: one grid step
    return int(max(128, min(max_cols, _round_up(pl.cdiv(cols, 4), 128))))


# ---------------------------------------------------------------------------
# Kernels
# ---------------------------------------------------------------------------

def _minmax_rows_kernel(t_ref, out_max_ref, out_min_ref, max_sc, min_sc,
                        *, rows_total, tile_rows, sub):
    """Dense path.  Grid (B, num_row_tiles); batch axis "parallel", row walk
    "arbitrary".  t_ref: (tile_rows, 128) tile of one batch row's data.
    Accumulators: single (sub, 128) f32 buffer, loaded/stored once per tile.
    """
    j = pl.program_id(1)
    last = pl.num_programs(1) - 1

    @pl.when(j == 0)
    def _():
        max_sc[...] = jnp.full_like(max_sc, -jnp.inf)
        min_sc[...] = jnp.full_like(min_sc, jnp.inf)

    def fold(n_full_slabs, tail_rows):
        mx = max_sc[...]
        mn = min_sc[...]

        def body(k, carry):
            cmx, cmn = carry
            start = pl.multiple_of(k * sub, sub)
            slab = t_ref[pl.ds(start, sub), :].astype(jnp.float32)
            return jnp.maximum(cmx, slab), jnp.minimum(cmn, slab)

        if n_full_slabs > 0:
            mx, mn = jax.lax.fori_loop(
                0, n_full_slabs, body, (mx, mn),
                unroll=n_full_slabs if n_full_slabs <= 8 else 8)
        if tail_rows:
            slab = t_ref[pl.ds(n_full_slabs * sub, sub), :].astype(jnp.float32)
            ok = jax.lax.broadcasted_iota(jnp.int32, slab.shape, 0) < tail_rows
            mx = jnp.maximum(mx, jnp.where(ok, slab, -jnp.inf))
            mn = jnp.minimum(mn, jnp.where(ok, slab, jnp.inf))
        max_sc[...] = mx
        min_sc[...] = mn

    rem_rows = rows_total % tile_rows
    if rem_rows == 0:
        fold(tile_rows // sub, 0)                 # all tiles full: fast path only
    else:
        @pl.when(j < last)                        # unmasked fast path
        def _():
            fold(tile_rows // sub, 0)

        @pl.when(j == last)                       # masked slow path, last step only
        def _():
            fold(rem_rows // sub, rem_rows % sub)

    # Finalize: single cross-sublane reduce to a lane-dense (1, 128) output.
    @pl.when(j == last)
    def _():
        out_max_ref[...] = jnp.max(max_sc[...], axis=0, keepdims=True)
        out_min_ref[...] = jnp.min(min_sc[...], axis=0, keepdims=True)


def _minmax_cols_kernel(t_ref, out_max_ref, out_min_ref, max_sc, min_sc,
                        *, cols_total, tile_cols):
    """Ragged-N path.  Grid (num_col_tiles,) over the raw [B, N] view.
    t_ref: (B, tile_cols).  Accumulators: single (B, 128) f32 buffer."""
    j = pl.program_id(0)
    last = pl.num_programs(0) - 1

    @pl.when(j == 0)
    def _():
        max_sc[...] = jnp.full_like(max_sc, -jnp.inf)
        min_sc[...] = jnp.full_like(min_sc, jnp.inf)

    def fold(n_full, tail_cols):
        mx = max_sc[...]
        mn = min_sc[...]

        def body(k, carry):
            cmx, cmn = carry
            start = pl.multiple_of(k * 128, 128)
            blk = t_ref[:, pl.ds(start, 128)].astype(jnp.float32)
            return jnp.maximum(cmx, blk), jnp.minimum(cmn, blk)

        if n_full > 0:
            mx, mn = jax.lax.fori_loop(
                0, n_full, body, (mx, mn),
                unroll=n_full if n_full <= 8 else 8)
        if tail_cols:
            blk = t_ref[:, pl.ds(n_full * 128, 128)].astype(jnp.float32)
            ok = jax.lax.broadcasted_iota(jnp.int32, blk.shape, 1) < tail_cols
            mx = jnp.maximum(mx, jnp.where(ok, blk, -jnp.inf))
            mn = jnp.minimum(mn, jnp.where(ok, blk, jnp.inf))
        max_sc[...] = mx
        min_sc[...] = mn

    rem = cols_total % tile_cols
    if rem == 0:
        fold(tile_cols // 128, 0)
    else:
        @pl.when(j < last)
        def _():
            fold(tile_cols // 128, 0)

        @pl.when(j == last)
        def _():
            fold(rem // 128, rem % 128)

    @pl.when(j == last)
    def _():
        out_max_ref[...] = max_sc[...]
        out_min_ref[...] = min_sc[...]


# ---------------------------------------------------------------------------
# Wrapper
# ---------------------------------------------------------------------------

@jax.jit
def minmax_loss(centers, target):
    """centers: [B, K]; target: [B, ...] (flattened over trailing dims)."""
    B = target.shape[0]
    t_flat = target.reshape(B, -1)                         # [B, N]
    N = t_flat.shape[1]
    itemsize = jnp.dtype(t_flat.dtype).itemsize

    cap = _vmem_capacity_bytes()
    vmem_limit = int(min(cap * 3 // 4, 96 * 1024 * 1024))  # 96 MiB v5e/v6e, 48 MiB v7x
    tile_budget = vmem_limit // 3                          # double-buffered input + slack

    if N >= 128 and N % 128 == 0:
        # --------------------- dense, sublane-packed path ---------------------
        R = N // 128
        main = t_flat.reshape(B, R, 128)                   # lane/sublane-dense view
        sub = _sublane_packing(t_flat.dtype)
        tile_rows = _pick_tile_rows(R, sub, itemsize, tile_budget)
        grid = (B, pl.cdiv(R, tile_rows))

        kernel = functools.partial(_minmax_rows_kernel, rows_total=R,
                                   tile_rows=tile_rows, sub=sub)

        mx, mn = pl.pallas_call(
            kernel,
            out_shape=(jax.ShapeDtypeStruct((B, 1, 128), jnp.float32),
                       jax.ShapeDtypeStruct((B, 1, 128), jnp.float32)),
            grid_spec=pltpu.PrefetchScalarGridSpec(
                num_scalar_prefetch=0,
                grid=grid,
                in_specs=[
                    pl.BlockSpec((None, tile_rows, 128), lambda b, j: (b, j, 0)),
                ],
                out_specs=(pl.BlockSpec((None, 1, 128), lambda b, j: (b, 0, 0)),
                           pl.BlockSpec((None, 1, 128), lambda b, j: (b, 0, 0))),
                scratch_shapes=[pltpu.VMEM((sub, 128), jnp.float32),   # running max
                                pltpu.VMEM((sub, 128), jnp.float32)],  # running min
            ),
            compiler_params=pltpu.CompilerParams(
                dimension_semantics=("parallel", "arbitrary"),
                vmem_limit_bytes=vmem_limit),
        )(main)

        maxT = jnp.max(mx[:, 0, :], axis=-1)
        minT = jnp.min(mn[:, 0, :], axis=-1)
    else:
        # -------- ragged N (incl. N < 128): run on [B, N], lane-mask tail -----
        tile_cols = _pick_tile_cols(N, B, itemsize, tile_budget)
        grid = (pl.cdiv(N, tile_cols),)

        kernel = functools.partial(_minmax_cols_kernel, cols_total=N,
                                   tile_cols=tile_cols)

        mx, mn = pl.pallas_call(
            kernel,
            out_shape=(jax.ShapeDtypeStruct((B, 128), jnp.float32),
                       jax.ShapeDtypeStruct((B, 128), jnp.float32)),
            grid_spec=pltpu.PrefetchScalarGridSpec(
                num_scalar_prefetch=0,
                grid=grid,
                in_specs=[pl.BlockSpec((B, tile_cols), lambda j: (0, j))],
                out_specs=(pl.BlockSpec((B, 128), lambda j: (0, 0)),
                           pl.BlockSpec((B, 128), lambda j: (0, 0))),
                scratch_shapes=[pltpu.VMEM((B, 128), jnp.float32),
                                pltpu.VMEM((B, 128), jnp.float32)],
            ),
            compiler_params=pltpu.CompilerParams(
                dimension_semantics=("arbitrary",),
                vmem_limit_bytes=vmem_limit),
        )(t_flat)

        maxT = jnp.max(mx, axis=-1)
        minT = jnp.min(mn, axis=-1)

    c = centers.astype(jnp.float32)
    return (jnp.sum(jnp.abs(c[:, -1] - maxT))
            + jnp.sum(jnp.abs(c[:, 0] - minT)))


def _reference(centers, target):
    T = target.reshape(target.shape[0], -1).astype(jnp.float32)
    maxT = T.max(axis=1)
    minT = T.min(axis=1)
    c = centers.astype(jnp.float32)
    return (jnp.sum(jnp.abs(c[:, -1] - maxT))
            + jnp.sum(jnp.abs(c[:, 0] - minT)))


if __name__ == "__main__":
    key = jax.random.PRNGKey(0)
    k1, k2, k3 = jax.random.split(key, 3)

    B, K = 2, 8                      # centers: [B, K]
    C, H, W = 4, 16, 16              # target:  [B, C, H, W] (NCHW), N = 1024

    centers = jax.random.normal(k1, (B, K), dtype=jnp.float32)
    target = jax.random.normal(k2, (B, C, H, W), dtype=jnp.float32)

    loss = minmax_loss(centers, target)
    jax.block_until_ready(loss)
    ref = _reference(centers, target)
    assert jnp.allclose(loss, ref, rtol=1e-5, atol=1e-5), (loss, ref)

    # Ragged-N path (N = 231): runs directly on the [B, N] view with lane mask.
    target2 = jax.random.normal(k3, (B, 3, 7, 11), dtype=jnp.float32)
    loss2 = minmax_loss(centers, target2)
    jax.block_until_ready(loss2)
    ref2 = _reference(centers, target2)
    assert jnp.allclose(loss2, ref2, rtol=1e-5, atol=1e-5), (loss2, ref2)

    print("KERNEL_OK")
</pallas_src>

<mosaic_0001>
module attributes {stable_mosaic.version = 11 : i64} {
  func.func @_minmax_rows_kernel(%arg0: i32, %arg1: i32, %arg2: memref<1x8x128xf32, #tpu.memory_space<vmem>>, %arg3: memref<1x1x128xf32, #tpu.memory_space<vmem>>, %arg4: memref<1x1x128xf32, #tpu.memory_space<vmem>>, %arg5: memref<8x128xf32, #tpu.memory_space<vmem>>, %arg6: memref<8x128xf32, #tpu.memory_space<vmem>>) attributes {dimension_semantics = [#tpu.dimension_semantics<parallel>, #tpu.dimension_semantics<arbitrary>], iteration_bounds = array<i64: 2, 1>, scalar_prefetch = 0 : i64, scratch_operands = 2 : i64, tpu.core_type = #tpu.core_type<tc>, window_params = [{transform_indices = @transform_0, window_bounds = array<i64: 1, 8, 128>}, {transform_indices = @transform_1, window_bounds = array<i64: 1, 1, 128>}, {transform_indices = @transform_2, window_bounds = array<i64: 1, 1, 128>}]} {
    %c0_i32 = arith.constant 0 : i32
    %0 = arith.cmpi eq, %arg1, %c0_i32 : i32
    %1 = arith.extui %0 : i1 to i32
    %c0_i32_0 = arith.constant 0 : i32
    %2 = arith.cmpi ne, %1, %c0_i32_0 : i32
    scf.if %2 {
      %cst = arith.constant 0xFF800000 : f32
      %17 = vector.broadcast %cst : f32 to vector<8x128xf32>
      %c0_13 = arith.constant 0 : index
      %c0_14 = arith.constant 0 : index
      %18 = vector.load %arg5[%c0_13, %c0_14] : memref<8x128xf32, #tpu.memory_space<vmem>>, vector<8x128xf32>
      tpu.vector_store %arg5[%c0_13, %c0_14], %17 {strides = array<i32>} : memref<8x128xf32, #tpu.memory_space<vmem>>, vector<8x128xf32>,
      %cst_15 = arith.constant 0x7F800000 : f32
      %19 = vector.broadcast %cst_15 : f32 to vector<8x128xf32>
      %c0_16 = arith.constant 0 : index
      %c0_17 = arith.constant 0 : index
      %20 = vector.load %arg6[%c0_16, %c0_17] : memref<8x128xf32, #tpu.memory_space<vmem>>, vector<8x128xf32>
      tpu.vector_store %arg6[%c0_16, %c0_17], %19 {strides = array<i32>} : memref<8x128xf32, #tpu.memory_space<vmem>>, vector<8x128xf32>,
    } else {
    }
    %c0 = arith.constant 0 : index
    %c0_1 = arith.constant 0 : index
    %3 = vector.load %arg5[%c0, %c0_1] : memref<8x128xf32, #tpu.memory_space<vmem>>, vector<8x128xf32>
    %c0_2 = arith.constant 0 : index
    %c0_3 = arith.constant 0 : index
    %4 = vector.load %arg6[%c0_2, %c0_3] : memref<8x128xf32, #tpu.memory_space<vmem>>, vector<8x128xf32>
    %c0_i32_4 = arith.constant 0 : i32
    %c8_i32 = arith.constant 8 : i32
    %5 = arith.muli %c0_i32_4, %c8_i32 : i32
    %6 = tpu.assume_multiple %5, 8 : i32
    %c0_5 = arith.constant 0 : index
    %7 = arith.index_cast %6 : i32 to index
    %c0_6 = arith.constant 0 : index
    %8 = vector.load %arg2[%c0_5, %7, %c0_6] : memref<1x8x128xf32, #tpu.memory_space<vmem>>, vector<1x8x128xf32>
    %9 = vector.shape_cast %8 : vector<1x8x128xf32> to vector<8x128xf32>
    %10 = arith.maximumf %3, %9 : vector<8x128xf32>
    %11 = arith.minimumf %4, %9 : vector<8x128xf32>
    %c1_i32 = arith.constant 1 : i32
    %c0_7 = arith.constant 0 : index
    %c0_8 = arith.constant 0 : index
    %12 = vector.load %arg5[%c0_7, %c0_8] : memref<8x128xf32, #tpu.memory_space<vmem>>, vector<8x128xf32>
    tpu.vector_store %arg5[%c0_7, %c0_8], %10 {strides = array<i32>} : memref<8x128xf32, #tpu.memory_space<vmem>>, vector<8x128xf32>,
    %c0_9 = arith.constant 0 : index
    %c0_10 = arith.constant 0 : index
    %13 = vector.load %arg6[%c0_9, %c0_10] : memref<8x128xf32, #tpu.memory_space<vmem>>, vector<8x128xf32>
    tpu.vector_store %arg6[%c0_9, %c0_10], %11 {strides = array<i32>} : memref<8x128xf32, #tpu.memory_space<vmem>>, vector<8x128xf32>,
    %c0_i32_11 = arith.constant 0 : i32
    %14 = arith.cmpi eq, %arg1, %c0_i32_11 : i32
    %15 = arith.extui %14 : i1 to i32
    %c0_i32_12 = arith.constant 0 : i32
    %16 = arith.cmpi ne, %15, %c0_i32_12 : i32
    scf.if %16 {
      %c0_13 = arith.constant 0 : index
      %c0_14 = arith.constant 0 : index
      %17 = vector.load %arg5[%c0_13, %c0_14] : memref<8x128xf32, #tpu.memory_space<vmem>>, vector<8x128xf32>
      %cst = arith.constant dense<0xFF800000> : vector<128xf32>
      %18 = vector.multi_reduction <maximumf>, %17, %cst [0] : vector<8x128xf32> to vector<128xf32>
      %19 = vector.shape_cast %18 : vector<128xf32> to vector<1x128xf32>
      %c0_15 = arith.constant 0 : index
      %c0_16 = arith.constant 0 : index
      %c0_17 = arith.constant 0 : index
      %20 = vector.load %arg3[%c0_15, %c0_16, %c0_17] : memref<1x1x128xf32, #tpu.memory_space<vmem>>, vector<1x1x128xf32>
      %21 = vector.shape_cast %20 : vector<1x1x128xf32> to vector<1x128xf32>
      %22 = vector.shape_cast %19 : vector<1x128xf32> to vector<1x1x128xf32>
      tpu.vector_store %arg3[%c0_15, %c0_16, %c0_17], %22 {strides = array<i32>} : memref<1x1x128xf32, #tpu.memory_space<vmem>>, vector<1x1x128xf32>,
      %c0_18 = arith.constant 0 : index
      %c0_19 = arith.constant 0 : index
      %23 = vector.load %arg6[%c0_18, %c0_19] : memref<8x128xf32, #tpu.memory_space<vmem>>, vector<8x128xf32>
      %cst_20 = arith.constant dense<0x7F800000> : vector<128xf32>
      %24 = vector.multi_reduction <minimumf>, %23, %cst_20 [0] : vector<8x128xf32> to vector<128xf32>
      %25 = vector.shape_cast %24 : vector<128xf32> to vector<1x128xf32>
      %c0_21 = arith.constant 0 : index
      %c0_22 = arith.constant 0 : index
      %c0_23 = arith.constant 0 : index
      %26 = vector.load %arg4[%c0_21, %c0_22, %c0_23] : memref<1x1x128xf32, #tpu.memory_space<vmem>>, vector<1x1x128xf32>
      %27 = vector.shape_cast %26 : vector<1x1x128xf32> to vector<1x128xf32>
      %28 = vector.shape_cast %25 : vector<1x128xf32> to vector<1x1x128xf32>
      tpu.vector_store %arg4[%c0_21, %c0_22, %c0_23], %28 {strides = array<i32>} : memref<1x1x128xf32, #tpu.memory_space<vmem>>, vector<1x1x128xf32>,
    } else {
    }
    return
  }
  func.func @transform_0(%arg0: i32, %arg1: i32) -> (i32, i32, i32) {
    %c0_i32 = arith.constant 0 : i32
    %c0_i32_0 = arith.constant 0 : i32
    return %arg0, %arg1, %c0_i32 : i32, i32, i32
  }
  func.func @transform_1(%arg0: i32, %arg1: i32) -> (i32, i32, i32) {
    %c0_i32 = arith.constant 0 : i32
    %c0_i32_0 = arith.constant 0 : i32
    %c0_i32_1 = arith.constant 0 : i32
    return %arg0, %c0_i32, %c0_i32_0 : i32, i32, i32
  }
  func.func @transform_2(%arg0: i32, %arg1: i32) -> (i32, i32, i32) {
    %c0_i32 = arith.constant 0 : i32
    %c0_i32_0 = arith.constant 0 : i32
    %c0_i32_1 = arith.constant 0 : i32
    return %arg0, %c0_i32, %c0_i32_0 : i32, i32, i32
  }
}

</mosaic_0001>

<llo_original>
// kernel: minmax_loss.1
$region0: #{minmax_loss.1}
  #allocation0 [shape = 'u32[]', space=smem, size = 0x4, offset = 0x4, fixed_abs, tag = 'smem constant byte address 0x4 - core index']
  #allocation1 [shape = 'u32[72,128]{1,0:T(1,128)}', space=vmem, size = 0x9000, scoped, tag = 'internal scratch']
  #allocation2 [shape = 'f32[8,128]{1,0:T(8,128)}', space=vmem, size = 0x1000, scoped, tag = 'scratch operand']
  #allocation3 [shape = 'f32[8,128]{1,0:T(8,128)}', space=vmem, size = 0x1000, scoped, tag = 'scratch operand']
  %s0 = inlined_call_operand.vmem [shape: f32[2,8,128], index: 0, kind: input, shape index: {}]
  %s1 = inlined_call_operand.vmem [shape: f32[2,1,128], index: 1, kind: output, shape index: {0}]
  %s2 = inlined_call_operand.vmem [shape: f32[2,1,128], index: 2, kind: output, shape index: {1}]
  %3 = xla_tuple %s1, %s2
  %s4 = sld [smem:[#allocation0]]
  $region53: #{minmax_loss.1} parent=0
    _
  %s6 = ssub.s32 1, %s4
  %s7 = scalar_select 0, %s6, %s4
  loop: start=0, step=1, limit=4
  $region2: #{minmax_loss.1} parent=0 // loop_pre_header
    _
  $region3: #{minmax_loss.1} parent=0 // loop_header
    %s9 = sphi 0, %s13
    %p10 = scmp.ge.s32.totalorder %s9, 4
    %s16 = sphi 0, %s28
    %s17 = sphi 0, %s24
    %s18 = sphi 0, %s16
    %s19 = sphi 0, %s17
    %s20 = sphi 0, %s18
    %s21 = sphi 0, %s19
    %s33 = sphi 0, %s35
    %s36 = sphi 0, %s33
    %s37 = sphi 0, %s36
    %s53 = sphi 0, %s37
    %s59 = sphi 0, %s61
    %s62 = sphi 0, %s59
    %s63 = sphi 0, %s62
    %s79 = sphi 0, %s63
    %s85 = sphi 0, %s87
    %s88 = sphi 0, %s85
    %s89 = sphi 0, %s88
    %s105 = sphi 0, %s89
  $region4: #{minmax_loss.1} parent=0 // loop_header_branch
    %12 = sbr.rel (%p10) target = $region8
  $region5: #{minmax_loss.1} parent=0 // loop_body
    %s14 = ssub.s32 %s9, 1
    %s15 = ssub.s32 %s9, 2
    %s22 = sadd.s32 1, %s17
    %p23 = scmp.ge.s32.totalorder %s22, 1
    %s24 = scalar_select %p23, 0, %s22
    %s25 = sadd.s32 1, %s16
    %s26 = scalar_select %p23, %s25, %s16
    %p27 = scmp.ge.s32.totalorder %s26, 2
    %s28 = scalar_select %p27, 0, %s26
    %s29 = ssub.s32 %s16, %s28
    %s30 = ssub.s32 %s17, %s24
    %s31 = sor.u32 %s29, %s30
    %p32 = scmp.eq.s32.totalorder %s31, 0
    %s34 = sadd.s32 %s33, 1
    %s35 = scalar_select %p32, %s33, %s34
    %p38 = pneg %p32
    %p39 = scmp.eq.s32.totalorder %s9, 1
    %p40 = por %p38, %p39
    %p41 = scmp.ne.s32.totalorder %s33, %s36
    %p42 = scmp.eq.s32.totalorder %s9, 0
    %p43 = por %p41, %p42
    %p44 = scmp.ne.s32.totalorder %s33, %s36
    %p45 = scmp.eq.s32.totalorder %s14, 1
    %p46 = por %p44, %p45
    %p47 = scmp.ne.s32.totalorder %s36, %s37
    %p48 = scmp.eq.s32.totalorder %s14, 0
    %p49 = por %p47, %p48
    %p50 = scmp.ne.s32.totalorder %s36, %s37
    %p51 = scmp.eq.s32.totalorder %s15, 1
    %p52 = por %p50, %p51
    %p54 = scmp.ne.s32.totalorder %s37, %s53
    %p55 = scmp.eq.s32.totalorder %s15, 0
    %p56 = por %p54, %p55
    %s57 = ssub.s32 %s16, %s28
    %p58 = scmp.eq.s32.totalorder %s57, 0
    %s60 = sadd.s32 %s59, 1
    %s61 = scalar_select %p58, %s59, %s60
    %p64 = pneg %p58
    %p65 = scmp.eq.s32.totalorder %s9, 1
    %p66 = por %p64, %p65
    %p67 = scmp.ne.s32.totalorder %s59, %s62
    %p68 = scmp.eq.s32.totalorder %s9, 0
    %p69 = por %p67, %p68
    %p70 = scmp.ne.s32.totalorder %s59, %s62
    %p71 = scmp.eq.s32.totalorder %s14, 1
    %p72 = por %p70, %p71
    %p73 = scmp.ne.s32.totalorder %s62, %s63
    %p74 = scmp.eq.s32.totalorder %s14, 0
    %p75 = por %p73, %p74
    %p76 = scmp.ne.s32.totalorder %s62, %s63
    %p77 = scmp.eq.s32.totalorder %s15, 1
    %p78 = por %p76, %p77
    %p80 = scmp.ne.s32.totalorder %s63, %s79
    %p81 = scmp.eq.s32.totalorder %s15, 0
    %p82 = por %p80, %p81
    %s83 = ssub.s32 %s16, %s28
    %p84 = scmp.eq.s32.totalorder %s83, 0
    %s86 = sadd.s32 %s85, 1
    %s87 = scalar_select %p84, %s85, %s86
    %p90 = pneg %p84
    %p91 = scmp.eq.s32.totalorder %s9, 1
    %p92 = por %p90, %p91
    %p93 = scmp.ne.s32.totalorder %s85, %s88
    %p94 = scmp.eq.s32.totalorder %s9, 0
    %p95 = por %p93, %p94
    %p96 = scmp.ne.s32.totalorder %s85, %s88
    %p97 = scmp.eq.s32.totalorder %s14, 1
    %p98 = por %p96, %p97
    %p99 = scmp.ne.s32.totalorder %s88, %s89
    %p100 = scmp.eq.s32.totalorder %s14, 0
    %p101 = por %p99, %p100
    %p102 = scmp.ne.s32.totalorder %s88, %s89
    %p103 = scmp.eq.s32.totalorder %s15, 1
    %p104 = por %p102, %p103
    %p106 = scmp.ne.s32.totalorder %s89, %s105
    %p107 = scmp.eq.s32.totalorder %s15, 0
    %p108 = por %p106, %p107
    %p109 = scmp.le.s32.totalorder 1, %s9
    %p110 = scmp.lt.s32.totalorder %s9, 3
    %p111 = pnand %p109, %p110
    %p112 = pneg %p111
    // Predicated region
    $region9: #{minmax_loss.1} parent=5 // pred_check
      _
    $region10: #{minmax_loss.1} parent=5 // pred_check_branch
      %114 = sbr.rel (%p111) target = $region12
    $region11: #{minmax_loss.1} parent=5 // pred_region
      %s115 = ssub.s32 %s9, 1
    $region12: #{minmax_loss.1} parent=5 // pred_fallthru
      _
    %p116 = scmp.lt.s32.totalorder %s9, 2
    // Predicated region
    $region13: #{minmax_loss.1} parent=5 // pred_check
      %p117 = pneg %p116
    $region14: #{minmax_loss.1} parent=5 // pred_check_branch
      %119 = sbr.rel (%p117) target = $region16
    $region15: #{minmax_loss.1} parent=5 // pred_region
      // Predicated region
      $region17: #{minmax_loss.1} parent=15 // pred_check
        %p120 = pneg %p43
      $region18: #{minmax_loss.1} parent=15 // pred_check_branch
        %122 = sbr.rel (%p120) target = $region20
      $region19: #{minmax_loss.1} parent=15 // pred_region
        %p123 = scmp.lt.s32.totalorder %s16, 1
        %s124 = scalar_select %p123, %s16, 1
        %p125 = scmp.lt.s32.totalorder %s17, 0
        %s126 = scalar_select %p125, %s17, 0
        %s127 = sadd.s32 %s126, %s124
        %s128 = smul.addr %s127, 8
        %s129 = scalar_lea.vmem %s0, %s128
      $region20: #{minmax_loss.1} parent=15 // pred_fallthru
        _
    $region16: #{minmax_loss.1} parent=5 // pred_fallthru
      _
    %p130 = scmp.le.s32.totalorder 1, %s9
    %p131 = scmp.lt.s32.totalorder %s9, 3
    %p132 = pnand %p130, %p131
    %p133 = pneg %p132
    // Predicated region
    $region21: #{minmax_loss.1} parent=5 // pred_check
      _
    $region22: #{minmax_loss.1} parent=5 // pred_check_branch
      %135 = sbr.rel (%p132) target = $region24
    $region23: #{minmax_loss.1} parent=5 // pred_region
      %s136 = ssub.s32 %s9, 1
      %p137 = scmp.lt.s32.totalorder %s18, 1
      %s138 = scalar_select %p137, %s18, 1
      %p139 = scmp.lt.s32.totalorder %s19, 0
      %s140 = scalar_select %p139, %s19, 0
      %s141 = sadd.s32 %s140, %s138
      %s142 = smul.addr %s141, 8
      %s143 = scalar_lea.vmem %s0, %s142
      %p144 = pneg %p49
      %p145 = pneg %p46
      %p146 = pneg %p75
      %p147 = pneg %p72
      %p148 = scmp.lt.s32.totalorder %s18, 1
      %s149 = scalar_select %p148, %s18, 1
      %s150 = scalar_lea.vmem %s1, %s149
      %p151 = pneg %p101
      %p152 = pneg %p98
      %p153 = scmp.lt.s32.totalorder %s18, 1
      %s154 = scalar_select %p153, %s18, 1
      %s155 = scalar_lea.vmem %s2, %s154
      %p156 = scmp.lt.s32.totalorder %s18, 1
      %s157 = scalar_select %p156, %s18, 1
      %p158 = scmp.lt.s32.totalorder %s19, 0
      %s159 = scalar_select %p158, %s19, 0
      %s160 = sadd.s32 %s159, %s157
      %s161 = smul.addr %s160, 8
      %s162 = scalar_lea.vmem %s0, %s161
      %p163 = scmp.lt.s32.totalorder %s18, 1
      %s164 = scalar_select %p163, %s18, 1
      %s165 = scalar_lea.vmem %s1, %s164
      %p166 = scmp.lt.s32.totalorder %s18, 1
      %s167 = scalar_select %p166, %s18, 1
      %s168 = scalar_lea.vmem %s2, %s167
      %p169 = scmp.eq.s32.totalorder %s19, 0
      // Predicated region
      $region25: #{minmax_loss.1} parent=23 // pred_check
        %p170 = pneg %p169
      $region26: #{minmax_loss.1} parent=23 // pred_check_branch
        %172 = sbr.rel (%p170) target = $region28
      $region27: #{minmax_loss.1} parent=23 // pred_region
        %173 = vst [vmem:[#allocation2] sm:$0xff] -inf
        %174 = vst [vmem:[#allocation3] sm:$0xff] inf
      $region28: #{minmax_loss.1} parent=23 // pred_fallthru
        _
      %v175 = vld [vmem:[#allocation2] sm:$0xff]
      %v176 = vld [vmem:[#allocation3] sm:$0xff]
      %v177 = vld [vmem:[%s162] sm:$0xff]
      %v178 = vmax.f32 %v175, %v177
      %v179 = vmin.f32 %v176, %v177
      %180 = vst [vmem:[#allocation2] sm:$0xff] %v178
      %181 = vst [vmem:[#allocation3] sm:$0xff] %v179
      // Predicated region
      $region29: #{minmax_loss.1} parent=23 // pred_check
        %p182 = pneg %p169
      $region30: #{minmax_loss.1} parent=23 // pred_check_branch
        %184 = sbr.rel (%p182) target = $region32
      $region31: #{minmax_loss.1} parent=23 // pred_region
        %v185 = vld [vmem:[#allocation2] sm:$0xff]
        %v186 = vrot.slane %v185, 4
        %v187 = vmax.f32 %v185, %v186
        %v188 = vrot.slane %v187, 2
        %v189 = vmax.f32 %v187, %v188
        %v190 = vrot.slane %v189, 1
        %v191 = vmax.f32 %v189, %v190
        %192 = vst [vmem:[%s165] sm:$0x1] %v191
        %v193 = vld [vmem:[#allocation3] sm:$0xff]
        %v194 = vrot.slane %v193, 4
        %v195 = vmin.f32 %v193, %v194
        %v196 = vrot.slane %v195, 2
        %v197 = vmin.f32 %v195, %v196
        %v198 = vrot.slane %v197, 1
        %v199 = vmin.f32 %v197, %v198
        %200 = vst [vmem:[%s168] sm:$0x1] %v199
      $region32: #{minmax_loss.1} parent=23 // pred_fallthru
        _
      %p201 = scmp.lt.s32.totalorder %s18, 1
      %s202 = scalar_select %p201, %s18, 1
      %s203 = scalar_lea.vmem %s1, %s202
      %p204 = scmp.lt.s32.totalorder %s18, 1
      %s205 = scalar_select %p204, %s18, 1
      %s206 = scalar_lea.vmem %s2, %s205
      // Predicated region
      $region33: #{minmax_loss.1} parent=23 // pred_check
        %p207 = pneg %p72
      $region34: #{minmax_loss.1} parent=23 // pred_check_branch
        %209 = sbr.rel (%p207) target = $region36
      $region35: #{minmax_loss.1} parent=23 // pred_region
        _
      $region36: #{minmax_loss.1} parent=23 // pred_fallthru
        _
      // Predicated region
      $region37: #{minmax_loss.1} parent=23 // pred_check
        %p210 = pneg %p98
      $region38: #{minmax_loss.1} parent=23 // pred_check_branch
        %212 = sbr.rel (%p210) target = $region40
      $region39: #{minmax_loss.1} parent=23 // pred_region
        _
      $region40: #{minmax_loss.1} parent=23 // pred_fallthru
        _
    $region24: #{minmax_loss.1} parent=5 // pred_fallthru
      _
    %p213 = scmp.le.s32.totalorder 2, %s9
    // Predicated region
    $region41: #{minmax_loss.1} parent=5 // pred_check
      %p214 = pneg %p213
    $region42: #{minmax_loss.1} parent=5 // pred_check_branch
      %216 = sbr.rel (%p214) target = $region44
    $region43: #{minmax_loss.1} parent=5 // pred_region
      %s217 = ssub.s32 %s9, 2
      // Predicated region
      $region45: #{minmax_loss.1} parent=43 // pred_check
        %p218 = pneg %p78
      $region46: #{minmax_loss.1} parent=43 // pred_check_branch
        %220 = sbr.rel (%p218) target = $region48
      $region47: #{minmax_loss.1} parent=43 // pred_region
        %p221 = scmp.lt.s32.totalorder %s20, 1
        %s222 = scalar_select %p221, %s20, 1
        %s223 = scalar_lea.vmem %s1, %s222
      $region48: #{minmax_loss.1} parent=43 // pred_fallthru
        _
      // Predicated region
      $region49: #{minmax_loss.1} parent=43 // pred_check
        %p224 = pneg %p104
      $region50: #{minmax_loss.1} parent=43 // pred_check_branch
        %226 = sbr.rel (%p224) target = $region52
      $region51: #{minmax_loss.1} parent=43 // pred_region
        %p227 = scmp.lt.s32.totalorder %s20, 1
        %s228 = scalar_select %p227, %s20, 1
        %s229 = scalar_lea.vmem %s2, %s228
      $region52: #{minmax_loss.1} parent=43 // pred_fallthru
        _
    $region44: #{minmax_loss.1} parent=5 // pred_fallthru
      _
  $region6: #{minmax_loss.1} parent=0 // loop_footer
    %s13 = sadd.s32 1, %s9
  $region7: #{minmax_loss.1} parent=0 // loop_footer_branch
    %8 = sbr.rel target = $region3
  $region8: #{minmax_loss.1} parent=0 // loop_exit
    _

</llo_original>
